<compile_context>
chip_gen: v6e
topology: v6e:2x2x1
jax: 0.10.0
libtpu: 0.0.40
codegen_flags: <defaults>
</compile_context>

<pallas_src>
import math

import numpy as np

import jax
import jax.numpy as jnp
from jax.experimental import pallas as pl
from jax.experimental.pallas import tpu as pltpu


# ----------------------------------------------------------------------------
# Weight construction (mirrors GaussianSmoothing.__init__)
# ----------------------------------------------------------------------------
def make_gaussian_factors(kernel_size, sigma, dim=2):
    """1-D normalized Gaussian taps per spatial dim (the module's 2-D kernel is
    exactly the outer product of these, normalized — sum(outer) = sum_h*sum_w)."""
    if isinstance(kernel_size, (int, float)):
        kernel_size = [int(kernel_size)] * dim
    if isinstance(sigma, (int, float)):
        sigma = [float(sigma)] * dim
    factors = []
    for size, std in zip(kernel_size, sigma):
        xs = np.arange(size, dtype=np.float64)
        mean = (size - 1) / 2.0
        g = np.exp(-(((xs - mean) / std) ** 2) / 2.0)
        factors.append(g / g.sum())
    return factors  # [gh (Kh,), gw (Kw,)]


def make_gaussian_weight_2d(channels, kernel_size, sigma, dim=2):
    """Faithful (C, Kh, Kw) depthwise weight, used only for the lax reference."""
    if isinstance(kernel_size, (int, float)):
        kernel_size = [int(kernel_size)] * dim
    if isinstance(sigma, (int, float)):
        sigma = [float(sigma)] * dim
    grids = np.meshgrid(
        *[np.arange(s, dtype=np.float32) for s in kernel_size], indexing="ij")
    kernel = np.ones((), dtype=np.float32)
    for size, std, mgrid in zip(kernel_size, sigma, grids):
        mean = (size - 1) / 2.0
        kernel = kernel * (
            np.exp(-(((mgrid - mean) / std) ** 2) / 2.0)
            / (std * math.sqrt(2.0 * math.pi)))
    kernel = kernel / kernel.sum()
    return jnp.asarray(
        np.broadcast_to(kernel[None, :, :],
                        (channels, kernel_size[0], kernel_size[1])).copy())


# ----------------------------------------------------------------------------
# Grid / block sizing
# ----------------------------------------------------------------------------
def _pick_num_lane_blocks(B, W, H, Hout, itemsize, budget_bytes=16 << 20):
    """Number of grid steps over the fused N*C image axis.

    Prefer >=2 lane-aligned blocks (block width a multiple of 128 lanes, whole
    images per block) so v7x's two TensorCores both get work, while keeping the
    per-step footprint well under v7x's 64 MiB VMEM.  Fall back to a single
    full-width block (legal because it equals the array extent)."""
    def step_bytes(g):
        lane = (B // g) * W
        # double-buffered in/out tiles + two f32 working arrays in the kernel
        return 2 * lane * (H + Hout) * itemsize + 2 * lane * H * 4

    candidates = [g for g in range(2, B + 1)
                  if B % g == 0 and ((B // g) * W) % 128 == 0]
    for g in candidates:                 # smallest g first => fewest, fattest steps
        if step_bytes(g) <= budget_bytes:
            return g
    if step_bytes(1) <= budget_bytes or not candidates:
        # TODO(synk): halo-tile H (Kh-1 overlap rows) for images too large for a
        #             single full-height block per step.
        return 1
    return candidates[-1]


# ----------------------------------------------------------------------------
# Pallas forward
# ----------------------------------------------------------------------------
def gaussian_smoothing_2d(x, gh, gw):
    """Depthwise VALID Gaussian blur.

    x:  (N, C, H, W)
    gh: (Kh,) 1-D column taps (numpy / python floats, concrete at trace time)
    gw: (Kw,) 1-D row taps
    Returns (N, C, H-Kh+1, W-Kw+1), same dtype as x.
    """
    N, C, H, W = x.shape
    Kh, Kw = len(gh), len(gw)
    Hout, Wout = H - Kh + 1, W - Kw + 1
    B = N * C

    # Bake taps as compile-time immediates (no SMEM, no scalar gathers).
    wh_t = tuple(float(v) for v in gh)
    wv_t = tuple(float(v) for v in gw)

    # Lane-dense layout: one (H, B*W) slab with all images side by side on the
    # lane axis.  Pure layout plumbing done by XLA outside the kernel.
    x_flat = jnp.transpose(x.reshape(B, H, W), (1, 0, 2)).reshape(H, B * W)

    g = _pick_num_lane_blocks(B, W, H, Hout, jnp.dtype(x.dtype).itemsize)
    bc = B // g                 # images per grid step
    Lb = bc * W                 # lanes per block (multiple of 128, or full width)

    def kernel(x_ref, o_ref):
        # x_ref: (H, Lb) slab of `bc` images. Cast to f32 once, not per tap.
        xf = x_ref[...].astype(jnp.float32)
        lanes = xf.shape[1]

        # Row (W) pass: lane roll brings column j+kj onto column j (XLU slot).
        # The roll wraps across image boundaries, but only into columns
        # j >= Wout of each image's W-segment, which the wrapper crops away.
        tmp = wv_t[0] * xf
        for kj in range(1, Kw):
            tmp = tmp + wv_t[kj] * pltpu.roll(xf, shift=lanes - kj, axis=1)

        # Column (H) pass: sublane roll brings row i+ki onto row i.  Rows
        # i >= Hout are wrap garbage and are dropped by the slice below.
        acc = wh_t[0] * tmp
        for ki in range(1, Kh):
            acc = acc + wh_t[ki] * pltpu.roll(tmp, shift=H - ki, axis=0)

        o_ref[...] = acc[:Hout, :].astype(o_ref.dtype)

    out_flat = pl.pallas_call(
        kernel,
        out_shape=jax.ShapeDtypeStruct((Hout, B * W), x.dtype),
        grid=(g,),
        in_specs=[pl.BlockSpec((H, Lb), lambda i: (0, i))],
        out_specs=pl.BlockSpec((Hout, Lb), lambda i: (0, i)),
        compiler_params=pltpu.CompilerParams(
            dimension_semantics=("parallel",),
            vmem_limit_bytes=48 << 20),
    )(x_flat)

    # Crop the Kw-1 junk columns of each image segment and restore NCHW.
    out = out_flat.reshape(Hout, B, W)[:, :, :Wout]
    out = jnp.transpose(out, (1, 0, 2)).reshape(N, C, Hout, Wout)
    return out


# ----------------------------------------------------------------------------
# Smoke test
# ----------------------------------------------------------------------------
if __name__ == "__main__":
    channels, kernel_size, sigma = 4, 5, 1.0
    N, H, W = 2, 16, 16

    key = jax.random.PRNGKey(0)
    x = jax.random.uniform(key, (N, channels, H, W), dtype=jnp.float32)

    gh, gw = make_gaussian_factors(kernel_size, sigma, dim=2)
    fwd = jax.jit(lambda xx: gaussian_smoothing_2d(xx, gh, gw))

    out = jax.block_until_ready(fwd(x))

    # Reference: depthwise conv with the module's replicated 2-D weight.
    weight = make_gaussian_weight_2d(channels, kernel_size, sigma, dim=2)
    ref = jax.lax.conv_general_dilated(
        x, weight[:, None, :, :], window_strides=(1, 1), padding="VALID",
        dimension_numbers=("NCHW", "OIHW", "NCHW"),
        feature_group_count=channels)

    assert out.shape == (N, channels, H - kernel_size + 1, W - kernel_size + 1)
    assert jnp.allclose(out, ref, atol=1e-5, rtol=1e-5), "mismatch vs reference conv"
    print("KERNEL_OK")
</pallas_src>

<mosaic_0001>
module attributes {stable_mosaic.version = 11 : i64} {
  func.func @kernel(%arg0: i32, %arg1: memref<16x128xf32, #tpu.memory_space<vmem>>, %arg2: memref<12x128xf32, #tpu.memory_space<vmem>>) attributes {dimension_semantics = [#tpu.dimension_semantics<parallel>], iteration_bounds = array<i64: 1>, scalar_prefetch = 0 : i64, scratch_operands = 0 : i64, tpu.core_type = #tpu.core_type<tc>, window_params = [{transform_indices = @transform_0, window_bounds = array<i64: 16, 128>}, {transform_indices = @transform_1, window_bounds = array<i64: 12, 128>}]} {
    %c0 = arith.constant 0 : index
    %c0_0 = arith.constant 0 : index
    %0 = vector.load %arg1[%c0, %c0_0] : memref<16x128xf32, #tpu.memory_space<vmem>>, vector<16x128xf32>
    %cst = arith.constant 0.054488685 : f32
    %1 = vector.broadcast %cst : f32 to vector<16x128xf32>
    %2 = arith.mulf %1, %0 : vector<16x128xf32>
    %c127_i32 = arith.constant 127 : i32
    %3 = tpu.dynamic_rotate %0 by %c127_i32 dim 1 : vector<16x128xf32>, i32 -> vector<16x128xf32>
    %cst_1 = arith.constant 0.244201347 : f32
    %4 = vector.broadcast %cst_1 : f32 to vector<16x128xf32>
    %5 = arith.mulf %4, %3 : vector<16x128xf32>
    %6 = arith.addf %2, %5 : vector<16x128xf32>
    %c126_i32 = arith.constant 126 : i32
    %7 = tpu.dynamic_rotate %0 by %c126_i32 dim 1 : vector<16x128xf32>, i32 -> vector<16x128xf32>
    %cst_2 = arith.constant 0.402619958 : f32
    %8 = vector.broadcast %cst_2 : f32 to vector<16x128xf32>
    %9 = arith.mulf %8, %7 : vector<16x128xf32>
    %10 = arith.addf %6, %9 : vector<16x128xf32>
    %c125_i32 = arith.constant 125 : i32
    %11 = tpu.dynamic_rotate %0 by %c125_i32 dim 1 : vector<16x128xf32>, i32 -> vector<16x128xf32>
    %cst_3 = arith.constant 0.244201347 : f32
    %12 = vector.broadcast %cst_3 : f32 to vector<16x128xf32>
    %13 = arith.mulf %12, %11 : vector<16x128xf32>
    %14 = arith.addf %10, %13 : vector<16x128xf32>
    %c124_i32 = arith.constant 124 : i32
    %15 = tpu.dynamic_rotate %0 by %c124_i32 dim 1 : vector<16x128xf32>, i32 -> vector<16x128xf32>
    %cst_4 = arith.constant 0.054488685 : f32
    %16 = vector.broadcast %cst_4 : f32 to vector<16x128xf32>
    %17 = arith.mulf %16, %15 : vector<16x128xf32>
    %18 = arith.addf %14, %17 : vector<16x128xf32>
    %cst_5 = arith.constant 0.054488685 : f32
    %19 = vector.broadcast %cst_5 : f32 to vector<16x128xf32>
    %20 = arith.mulf %19, %18 : vector<16x128xf32>
    %c15_i32 = arith.constant 15 : i32
    %21 = tpu.dynamic_rotate %18 by %c15_i32 dim 0 : vector<16x128xf32>, i32 -> vector<16x128xf32>
    %cst_6 = arith.constant 0.244201347 : f32
    %22 = vector.broadcast %cst_6 : f32 to vector<16x128xf32>
    %23 = arith.mulf %22, %21 : vector<16x128xf32>
    %24 = arith.addf %20, %23 : vector<16x128xf32>
    %c14_i32 = arith.constant 14 : i32
    %25 = tpu.dynamic_rotate %18 by %c14_i32 dim 0 : vector<16x128xf32>, i32 -> vector<16x128xf32>
    %cst_7 = arith.constant 0.402619958 : f32
    %26 = vector.broadcast %cst_7 : f32 to vector<16x128xf32>
    %27 = arith.mulf %26, %25 : vector<16x128xf32>
    %28 = arith.addf %24, %27 : vector<16x128xf32>
    %c13_i32 = arith.constant 13 : i32
    %29 = tpu.dynamic_rotate %18 by %c13_i32 dim 0 : vector<16x128xf32>, i32 -> vector<16x128xf32>
    %cst_8 = arith.constant 0.244201347 : f32
    %30 = vector.broadcast %cst_8 : f32 to vector<16x128xf32>
    %31 = arith.mulf %30, %29 : vector<16x128xf32>
    %32 = arith.addf %28, %31 : vector<16x128xf32>
    %c12_i32 = arith.constant 12 : i32
    %33 = tpu.dynamic_rotate %18 by %c12_i32 dim 0 : vector<16x128xf32>, i32 -> vector<16x128xf32>
    %cst_9 = arith.constant 0.054488685 : f32
    %34 = vector.broadcast %cst_9 : f32 to vector<16x128xf32>
    %35 = arith.mulf %34, %33 : vector<16x128xf32>
    %36 = arith.addf %32, %35 : vector<16x128xf32>
    %37 = vector.extract_strided_slice %36 {offsets = [0, 0], sizes = [12, 128], strides = [1, 1]} : vector<16x128xf32> to vector<12x128xf32>
    %c0_10 = arith.constant 0 : index
    %c0_11 = arith.constant 0 : index
    %38 = vector.load %arg2[%c0_10, %c0_11] : memref<12x128xf32, #tpu.memory_space<vmem>>, vector<12x128xf32>
    tpu.vector_store %arg2[%c0_10, %c0_11], %37 {strides = array<i32>} : memref<12x128xf32, #tpu.memory_space<vmem>>, vector<12x128xf32>,
    return
  }
  func.func @transform_0(%arg0: i32) -> (i32, i32) {
    %c0_i32 = arith.constant 0 : i32
    %c0_i32_0 = arith.constant 0 : i32
    return %c0_i32, %arg0 : i32, i32
  }
  func.func @transform_1(%arg0: i32) -> (i32, i32) {
    %c0_i32 = arith.constant 0 : i32
    %c0_i32_0 = arith.constant 0 : i32
    return %c0_i32, %arg0 : i32, i32
  }
}

</mosaic_0001>

<llo_original>
// kernel: _lambda_.1
$region0: #{_lambda_.1}
  #allocation0 [shape = 'u32[]', space=smem, size = 0x4, offset = 0x4, fixed_abs, tag = 'smem constant byte address 0x4 - core index']
  #allocation1 [shape = 'u32[144,128]{1,0:T(1,128)}', space=vmem, size = 0x12000, scoped, tag = 'internal scratch']
  %s0 = inlined_call_operand.vmem [shape: f32[16,128], index: 0, kind: input, shape index: {}]
  %s1 = inlined_call_operand.vmem [shape: f32[12,128], index: 1, kind: output, shape index: {}]
  %s2 = sld [smem:[#allocation0]]
  $region14: #{_lambda_.1} parent=0
    _
  %s4 = ssub.s32 1, %s2
  %s5 = scalar_select 0, %s4, %s2
  // Predicated region
  $region2: #{_lambda_.1} parent=0 // pred_check
    _
  $region3: #{_lambda_.1} parent=0 // pred_check_branch
    %7 = sbr.rel (0) target = $region5
  $region4: #{_lambda_.1} parent=0 // pred_region
    _
  $region5: #{_lambda_.1} parent=0 // pred_fallthru
    _
  %v8 = vld [vmem:[%s0] sm:$0xff]
  %v9 = vld [vmem:[%s0 + $0x8] sm:$0xff]
  %v10 = vmul.f32 %v8, 0.054488685
  %v11 = vmul.f32 %v9, 0.054488685
  %12 = vrot.lane.b32.xlu0 %v8, 127
  %v13 = vpop.permute.xlu0 %12
  %14 = vrot.lane.b32.xlu0 %v9, 127
  %v15 = vpop.permute.xlu0 %14
  %v16 = vmul.f32 %v13, 0.24420135
  %v17 = vmul.f32 %v15, 0.24420135
  %v18 = vadd.f32 %v10, %v16
  %v19 = vadd.f32 %v11, %v17
  %20 = vrot.lane.b32.xlu0 %v8, 126
  %v21 = vpop.permute.xlu0 %20
  %22 = vrot.lane.b32.xlu0 %v9, 126
  %v23 = vpop.permute.xlu0 %22
  %v24 = vmul.f32 %v21, 0.40261996
  %v25 = vmul.f32 %v23, 0.40261996
  %v26 = vadd.f32 %v18, %v24
  %v27 = vadd.f32 %v19, %v25
  %28 = vrot.lane.b32.xlu0 %v8, 125
  %v29 = vpop.permute.xlu0 %28
  %30 = vrot.lane.b32.xlu0 %v9, 125
  %v31 = vpop.permute.xlu0 %30
  %v32 = vmul.f32 %v29, 0.24420135
  %v33 = vmul.f32 %v31, 0.24420135
  %v34 = vadd.f32 %v26, %v32
  %v35 = vadd.f32 %v27, %v33
  %36 = vrot.lane.b32.xlu0 %v8, 124
  %v37 = vpop.permute.xlu0 %36
  %38 = vrot.lane.b32.xlu0 %v9, 124
  %v39 = vpop.permute.xlu0 %38
  %v40 = vmul.f32 %v37, 0.054488685
  %v41 = vmul.f32 %v39, 0.054488685
  %v42 = vadd.f32 %v34, %v40
  %v43 = vadd.f32 %v35, %v41
  %v44 = vmul.f32 %v42, 0.054488685
  %v45 = vmul.f32 %v43, 0.054488685
  %v46 = vrot.slane %v42, 1
  %v47 = vrot.slane %v43, 1
  %v48 = vlaneseq
  %v49 = vshrl.u32 %v48, 7
  %vm50 = vcmp.lt.s32.totalorder %v49, 7
  %v51 = vsel %vm50, %v46, %v47
  %v52 = vsel %vm50, %v47, %v46
  %v53 = vmul.f32 %v51, 0.24420135
  %v54 = vmul.f32 %v52, 0.24420135
  %v55 = vadd.f32 %v44, %v53
  %v56 = vadd.f32 %v45, %v54
  %v57 = vrot.slane %v42, 2
  %v58 = vrot.slane %v43, 2
  %vm59 = vcmp.lt.s32.totalorder %v49, 6
  %v60 = vsel %vm59, %v57, %v58
  %v61 = vsel %vm59, %v58, %v57
  %v62 = vmul.f32 %v60, 0.40261996
  %v63 = vmul.f32 %v61, 0.40261996
  %v64 = vadd.f32 %v55, %v62
  %v65 = vadd.f32 %v56, %v63
  %v66 = vrot.slane %v42, 3
  %v67 = vrot.slane %v43, 3
  %vm68 = vcmp.lt.s32.totalorder %v49, 5
  %v69 = vsel %vm68, %v66, %v67
  %v70 = vsel %vm68, %v67, %v66
  %v71 = vmul.f32 %v69, 0.24420135
  %v72 = vmul.f32 %v70, 0.24420135
  %v73 = vadd.f32 %v64, %v71
  %v74 = vadd.f32 %v65, %v72
  %v75 = vrot.slane %v42, 4
  %v76 = vrot.slane %v43, 4
  %vm77 = vcmp.lt.s32.totalorder %v49, 4
  %v78 = vsel %vm77, %v75, %v76
  %v79 = vsel %vm77, %v76, %v75
  %v80 = vmul.f32 %v78, 0.054488685
  %v81 = vmul.f32 %v79, 0.054488685
  %v82 = vadd.f32 %v73, %v80
  %v83 = vadd.f32 %v74, %v81
  %84 = vst [vmem:[%s1] sm:$0xff] %v82
  %85 = vst [vmem:[%s1 + $0x8] sm:$0xf] %v83
  // Predicated region
  $region6: #{_lambda_.1} parent=0 // pred_check
    _
  $region7: #{_lambda_.1} parent=0 // pred_check_branch
    %87 = sbr.rel (0) target = $region9
  $region8: #{_lambda_.1} parent=0 // pred_region
    _
  $region9: #{_lambda_.1} parent=0 // pred_fallthru
    _
  // Predicated region
  $region10: #{_lambda_.1} parent=0 // pred_check
    _
  $region11: #{_lambda_.1} parent=0 // pred_check_branch
    %89 = sbr.rel (0) target = $region13
  $region12: #{_lambda_.1} parent=0 // pred_region
    _
  $region13: #{_lambda_.1} parent=0 // pred_fallthru
    _

</llo_original>
